<compile_context>
chip_gen: v5e
topology: v5e:2x2
jax: 0.10.0
libtpu: 0.0.40
codegen_flags: <defaults>
</compile_context>

<pallas_src>
import functools

import jax
import jax.numpy as jnp
from jax.experimental import pallas as pl
from jax.experimental.pallas import tpu as pltpu


# ----------------------------------------------------------------------------
# Kernel: vector-quantize one (C, TN) tile of pixels against the full codebook
# ----------------------------------------------------------------------------
def _vq_kernel(x_ref, emb_ref, embT_ref, esq_ref, quant_ref, counts_ref, ssq_ref):
    x = x_ref[...].astype(jnp.float32)        # (C, TN)   pixels, channels-first
    emb = emb_ref[...].astype(jnp.float32)    # (K, C)    codebook
    embT = embT_ref[...].astype(jnp.float32)  # (C, K)    codebook, transposed
    esq = esq_ref[...].astype(jnp.float32)    # (K, 1)    per-code squared norm

    # Squared-distance surrogate: d[k, n] = ||e_k||^2 - 2 <e_k, x_n>
    scores = jnp.dot(emb, x, preferred_element_type=jnp.float32)   # (K, TN)
    d = esq - 2.0 * scores                                         # (K, TN)

    # First-occurrence argmin over the codebook (sublane) axis.
    k = d.shape[0]
    dmin = jnp.min(d, axis=0, keepdims=True)                       # (1, TN)
    iota_f = jax.lax.broadcasted_iota(jnp.int32, d.shape, 0).astype(jnp.float32)
    first = jnp.min(jnp.where(d == dmin, iota_f, jnp.float32(k)),
                    axis=0, keepdims=True)                         # (1, TN)
    one_hot = (iota_f == first).astype(jnp.float32)                # (K, TN)

    # Dequantize: single long-K matmul (exact "gather" since weights are 0/1).
    quant = jnp.dot(embT, one_hot, preferred_element_type=jnp.float32)  # (C, TN)
    quant_ref[...] = quant.astype(quant_ref.dtype)

    # Fused epilogue: per-tile code histogram + squared-error partial sum.
    counts = jnp.sum(one_hot, axis=1, keepdims=True)               # (K, 1)
    counts_ref[...] = jnp.expand_dims(counts, 0)                   # (1, K, 1)

    diff = quant - x
    sq_c = jnp.sum(diff * diff, axis=1, keepdims=True)             # (C, 1)
    sq = jnp.sum(sq_c, axis=0, keepdims=True)                      # (1, 1)
    ssq_ref[...] = jnp.expand_dims(sq, 0)                          # (1, 1, 1)


def _pick_tile(n):
    """Largest lane-friendly tile that divides N (fallback: whole row)."""
    for t in (1024, 512, 256, 128, 64, 32, 16, 8):
        if n % t == 0:
            return t
    return n


# ----------------------------------------------------------------------------
# Public forward pass (eval-mode semantics of Codebook.forward)
# ----------------------------------------------------------------------------
@functools.partial(jax.jit, static_argnames=("beta",))
def codebook_forward(x, embeddings, *, beta=0.25):
    """x: (B, C, H, W); embeddings: (K, C).

    Returns (quant_out NCHW, quant_loss scalar, perplexity scalar)."""
    B, C, H, W = x.shape
    K, Cd = embeddings.shape
    assert Cd == C, (Cd, C)
    N = H * W
    TN = _pick_tile(N)
    num_tiles = N // TN

    x_flat = x.reshape(B, C, N)                               # free reshape (NCHW)
    emb_t = jnp.transpose(embeddings)                         # (C, K)  tiny
    esq = jnp.sum(embeddings * embeddings, axis=1, keepdims=True)   # (K, 1)

    quant_flat, counts_p, ssq_p = pl.pallas_call(
        _vq_kernel,
        out_shape=(
            jax.ShapeDtypeStruct((B, C, N), x.dtype),
            jax.ShapeDtypeStruct((B, num_tiles, K, 1), jnp.float32),
            jax.ShapeDtypeStruct((B, num_tiles, 1, 1), jnp.float32),
        ),
        grid=(B, num_tiles),
        in_specs=[
            pl.BlockSpec((None, C, TN), lambda b, n: (b, 0, n)),
            pl.BlockSpec((K, C), lambda b, n: (0, 0)),
            pl.BlockSpec((C, K), lambda b, n: (0, 0)),
            pl.BlockSpec((K, 1), lambda b, n: (0, 0)),
        ],
        out_specs=(
            pl.BlockSpec((None, C, TN), lambda b, n: (b, 0, n)),
            pl.BlockSpec((None, 1, K, 1), lambda b, n: (b, n, 0, 0)),
            pl.BlockSpec((None, 1, 1, 1), lambda b, n: (b, n, 0, 0)),
        ),
        compiler_params=pltpu.CompilerParams(
            dimension_semantics=("parallel", "parallel"),
            vmem_limit_bytes=32 * 1024 * 1024,
        ),
    )(x_flat, embeddings, emb_t, esq)

    quant = quant_flat.reshape(B, C, H, W)
    # Straight-through estimator (forward value == quantized vectors).
    quant_out = x + jax.lax.stop_gradient(quant - x)

    # Commitment loss = mean squared error over all (B*HW, C) elements.
    commitment_loss = jnp.sum(ssq_p) / (B * N * C)
    quant_loss = beta * commitment_loss

    # Perplexity from the code-usage histogram.
    counts = jnp.sum(counts_p, axis=(0, 1))[:, 0]             # (K,)
    avg_probs = counts / (B * N)
    perplexity = jnp.exp(-jnp.sum(avg_probs * jnp.log(avg_probs + 1e-6)))
    return quant_out, quant_loss, perplexity


# ----------------------------------------------------------------------------
# Pure-JAX reference (mirrors the PyTorch forward, eval mode)
# ----------------------------------------------------------------------------
def codebook_reference(x, embeddings, beta):
    B, C, H, W = x.shape
    K = embeddings.shape[0]
    xf = jnp.transpose(x.reshape(B, C, H * W), (0, 2, 1)).reshape(-1, C)
    d = jnp.sum(embeddings * embeddings, axis=1)[None, :] - 2.0 * xf @ embeddings.T
    idx = jnp.argmin(d, axis=-1)
    quant = embeddings[idx]
    commitment = jnp.mean((quant - xf) ** 2)
    quant_loss = beta * commitment
    st = xf + jax.lax.stop_gradient(quant - xf)
    out = jnp.transpose(st.reshape(B, H * W, C), (0, 2, 1)).reshape(B, C, H, W)
    one_hot = jax.nn.one_hot(idx, K, dtype=jnp.float32)
    avg = one_hot.mean(axis=0)
    perp = jnp.exp(-jnp.sum(avg * jnp.log(avg + 1e-6)))
    return out, quant_loss, perp


# ----------------------------------------------------------------------------
if __name__ == "__main__":
    # Codebook(size=128, dim=4, beta=0.25, gamma=0.99) on a (2, 4, 16, 16) input.
    size, dim, beta = 128, 4, 0.25

    key = jax.random.PRNGKey(0)
    k_emb, k_x = jax.random.split(key)
    embeddings = jax.random.uniform(
        k_emb, (size, dim), jnp.float32, minval=-1.0 / size, maxval=1.0 / size
    )
    x = jax.random.normal(k_x, (2, dim, 16, 16), jnp.float32)

    quant, quant_loss, perplexity = codebook_forward(x, embeddings, beta=beta)
    quant = jax.block_until_ready(quant)

    # Correctness check against the plain-JAX reference.
    q_ref, l_ref, p_ref = codebook_reference(x, embeddings, beta)
    assert quant.shape == x.shape, quant.shape
    assert bool(jnp.all(jnp.isfinite(quant)))
    assert bool(jnp.allclose(quant, q_ref, atol=1e-5, rtol=1e-5))
    assert bool(jnp.allclose(quant_loss, l_ref, atol=1e-6, rtol=1e-5))
    assert bool(jnp.allclose(perplexity, p_ref, atol=1e-4, rtol=1e-4))

    _ = float(perplexity)  # mirrors torch's .item()
    print("KERNEL_OK")
</pallas_src>

<mosaic_0001>
module attributes {stable_mosaic.version = 11 : i64} {
  func.func @_vq_kernel(%arg0: i32, %arg1: i32, %arg2: memref<1x4x256xf32, #tpu.memory_space<vmem>>, %arg3: memref<128x4xf32, #tpu.memory_space<vmem>>, %arg4: memref<4x128xf32, #tpu.memory_space<vmem>>, %arg5: memref<128x1xf32, #tpu.memory_space<vmem>>, %arg6: memref<1x4x256xf32, #tpu.memory_space<vmem>>, %arg7: memref<1x1x128x1xf32, #tpu.memory_space<vmem>>, %arg8: memref<1x1x1x1xf32, #tpu.memory_space<vmem>>) attributes {dimension_semantics = [#tpu.dimension_semantics<parallel>, #tpu.dimension_semantics<parallel>], iteration_bounds = array<i64: 2, 1>, scalar_prefetch = 0 : i64, scratch_operands = 0 : i64, tpu.core_type = #tpu.core_type<tc>, window_params = [{transform_indices = @transform_0, window_bounds = array<i64: 1, 4, 256>}, {pipeline_mode = #tpu.pipeline_mode<synchronous>, transform_indices = @transform_1, window_bounds = array<i64: 128, 4>}, {pipeline_mode = #tpu.pipeline_mode<synchronous>, transform_indices = @transform_2, window_bounds = array<i64: 4, 128>}, {pipeline_mode = #tpu.pipeline_mode<synchronous>, transform_indices = @transform_3, window_bounds = array<i64: 128, 1>}, {transform_indices = @transform_4, window_bounds = array<i64: 1, 4, 256>}, {transform_indices = @transform_5, window_bounds = array<i64: 1, 1, 128, 1>}, {transform_indices = @transform_6, window_bounds = array<i64: 1, 1, 1, 1>}]} {
    %c0 = arith.constant 0 : index
    %c0_0 = arith.constant 0 : index
    %c0_1 = arith.constant 0 : index
    %0 = vector.load %arg2[%c0, %c0_0, %c0_1] : memref<1x4x256xf32, #tpu.memory_space<vmem>>, vector<1x4x256xf32>
    %1 = vector.shape_cast %0 : vector<1x4x256xf32> to vector<4x256xf32>
    %c0_2 = arith.constant 0 : index
    %c0_3 = arith.constant 0 : index
    %2 = vector.load %arg3[%c0_2, %c0_3] : memref<128x4xf32, #tpu.memory_space<vmem>>, vector<128x4xf32>
    %c0_4 = arith.constant 0 : index
    %c0_5 = arith.constant 0 : index
    %3 = vector.load %arg4[%c0_4, %c0_5] : memref<4x128xf32, #tpu.memory_space<vmem>>, vector<4x128xf32>
    %c0_6 = arith.constant 0 : index
    %c0_7 = arith.constant 0 : index
    %4 = vector.load %arg5[%c0_6, %c0_7] : memref<128x1xf32, #tpu.memory_space<vmem>>, vector<128x1xf32>
    %cst = arith.constant dense<0.000000e+00> : vector<128x256xf32>
    %5 = tpu.matmul %2, %1, %cst {dimension_numbers = #tpu.dot_dimension_numbers<[1], [0], [0], [1], [0, 0, 1, 1], [], []>} : vector<128x4xf32>, vector<4x256xf32>, vector<128x256xf32> -> vector<128x256xf32>
    %cst_8 = arith.constant 2.000000e+00 : f32
    %6 = vector.broadcast %cst_8 : f32 to vector<128x256xf32>
    %7 = arith.mulf %6, %5 : vector<128x256xf32>
    %8 = vector.broadcast %4 : vector<128x1xf32> to vector<128x256xf32>
    %9 = arith.subf %8, %7 : vector<128x256xf32>
    %cst_9 = arith.constant dense<0x7F800000> : vector<256xf32>
    %10 = vector.multi_reduction <minimumf>, %9, %cst_9 [0] : vector<128x256xf32> to vector<256xf32>
    %11 = vector.shape_cast %10 : vector<256xf32> to vector<1x256xf32>
    %12 = tpu.iota {dimensions = array<i32: 0>} : vector<128x256xi32>
    %13 = arith.sitofp %12 : vector<128x256xi32> to vector<128x256xf32>
    %14 = vector.broadcast %11 : vector<1x256xf32> to vector<128x256xf32>
    %15 = arith.cmpf oeq, %9, %14 : vector<128x256xf32>
    %cst_10 = arith.constant 1.280000e+02 : f32
    %16 = vector.broadcast %cst_10 : f32 to vector<128x256xf32>
    %17 = arith.select %15, %13, %16 : vector<128x256xi1>, vector<128x256xf32>
    %cst_11 = arith.constant dense<0x7F800000> : vector<256xf32>
    %18 = vector.multi_reduction <minimumf>, %17, %cst_11 [0] : vector<128x256xf32> to vector<256xf32>
    %19 = vector.shape_cast %18 : vector<256xf32> to vector<1x256xf32>
    %20 = vector.broadcast %19 : vector<1x256xf32> to vector<128x256xf32>
    %21 = arith.cmpf oeq, %13, %20 : vector<128x256xf32>
    %22 = arith.extui %21 : vector<128x256xi1> to vector<128x256xi32>
    %23 = arith.sitofp %22 : vector<128x256xi32> to vector<128x256xf32>
    %cst_12 = arith.constant dense<0.000000e+00> : vector<4x256xf32>
    %24 = tpu.matmul %3, %23, %cst_12 {dimension_numbers = #tpu.dot_dimension_numbers<[1], [0], [0], [1], [0, 0, 1, 1], [], []>} : vector<4x128xf32>, vector<128x256xf32>, vector<4x256xf32> -> vector<4x256xf32>
    %c0_13 = arith.constant 0 : index
    %c0_14 = arith.constant 0 : index
    %c0_15 = arith.constant 0 : index
    %25 = vector.load %arg6[%c0_13, %c0_14, %c0_15] : memref<1x4x256xf32, #tpu.memory_space<vmem>>, vector<1x4x256xf32>
    %26 = vector.shape_cast %25 : vector<1x4x256xf32> to vector<4x256xf32>
    %27 = vector.shape_cast %24 : vector<4x256xf32> to vector<1x4x256xf32>
    tpu.vector_store %arg6[%c0_13, %c0_14, %c0_15], %27 {strides = array<i32>} : memref<1x4x256xf32, #tpu.memory_space<vmem>>, vector<1x4x256xf32>,
    %cst_16 = arith.constant dense<0.000000e+00> : vector<128xf32>
    %28 = vector.multi_reduction <add>, %23, %cst_16 [1] : vector<128x256xf32> to vector<128xf32>
    %29 = vector.shape_cast %28 : vector<128xf32> to vector<128x1xf32>
    %30 = vector.shape_cast %29 : vector<128x1xf32> to vector<1x128x1xf32>
    %c0_17 = arith.constant 0 : index
    %c0_18 = arith.constant 0 : index
    %c0_19 = arith.constant 0 : index
    %c0_20 = arith.constant 0 : index
    %31 = vector.load %arg7[%c0_17, %c0_18, %c0_19, %c0_20] : memref<1x1x128x1xf32, #tpu.memory_space<vmem>>, vector<1x1x128x1xf32>
    %32 = vector.shape_cast %31 : vector<1x1x128x1xf32> to vector<1x128x1xf32>
    %33 = vector.shape_cast %30 : vector<1x128x1xf32> to vector<1x1x128x1xf32>
    tpu.vector_store %arg7[%c0_17, %c0_18, %c0_19, %c0_20], %33 {strides = array<i32>} : memref<1x1x128x1xf32, #tpu.memory_space<vmem>>, vector<1x1x128x1xf32>,
    %34 = arith.subf %24, %1 : vector<4x256xf32>
    %35 = arith.mulf %34, %34 : vector<4x256xf32>
    %cst_21 = arith.constant dense<0.000000e+00> : vector<4xf32>
    %36 = vector.multi_reduction <add>, %35, %cst_21 [1] : vector<4x256xf32> to vector<4xf32>
    %37 = vector.shape_cast %36 : vector<4xf32> to vector<4x1xf32>
    %cst_22 = arith.constant dense<0.000000e+00> : vector<1xf32>
    %38 = vector.multi_reduction <add>, %37, %cst_22 [0] : vector<4x1xf32> to vector<1xf32>
    %39 = vector.shape_cast %38 : vector<1xf32> to vector<1x1xf32>
    %40 = vector.shape_cast %39 : vector<1x1xf32> to vector<1x1x1xf32>
    %c0_23 = arith.constant 0 : index
    %c0_24 = arith.constant 0 : index
    %c0_25 = arith.constant 0 : index
    %c0_26 = arith.constant 0 : index
    %41 = vector.load %arg8[%c0_23, %c0_24, %c0_25, %c0_26] : memref<1x1x1x1xf32, #tpu.memory_space<vmem>>, vector<1x1x1x1xf32>
    %42 = vector.shape_cast %41 : vector<1x1x1x1xf32> to vector<1x1x1xf32>
    %43 = vector.shape_cast %40 : vector<1x1x1xf32> to vector<1x1x1x1xf32>
    tpu.vector_store %arg8[%c0_23, %c0_24, %c0_25, %c0_26], %43 {strides = array<i32>} : memref<1x1x1x1xf32, #tpu.memory_space<vmem>>, vector<1x1x1x1xf32>,
    return
  }
  func.func @transform_0(%arg0: i32, %arg1: i32) -> (i32, i32, i32) {
    %c0_i32 = arith.constant 0 : i32
    %c0_i32_0 = arith.constant 0 : i32
    return %arg0, %c0_i32, %arg1 : i32, i32, i32
  }
  func.func @transform_1(%arg0: i32, %arg1: i32) -> (i32, i32) {
    %c0_i32 = arith.constant 0 : i32
    %c0_i32_0 = arith.constant 0 : i32
    %c0_i32_1 = arith.constant 0 : i32
    return %c0_i32, %c0_i32_0 : i32, i32
  }
  func.func @transform_2(%arg0: i32, %arg1: i32) -> (i32, i32) {
    %c0_i32 = arith.constant 0 : i32
    %c0_i32_0 = arith.constant 0 : i32
    %c0_i32_1 = arith.constant 0 : i32
    return %c0_i32, %c0_i32_0 : i32, i32
  }
  func.func @transform_3(%arg0: i32, %arg1: i32) -> (i32, i32) {
    %c0_i32 = arith.constant 0 : i32
    %c0_i32_0 = arith.constant 0 : i32
    %c0_i32_1 = arith.constant 0 : i32
    return %c0_i32, %c0_i32_0 : i32, i32
  }
  func.func @transform_4(%arg0: i32, %arg1: i32) -> (i32, i32, i32) {
    %c0_i32 = arith.constant 0 : i32
    %c0_i32_0 = arith.constant 0 : i32
    return %arg0, %c0_i32, %arg1 : i32, i32, i32
  }
  func.func @transform_5(%arg0: i32, %arg1: i32) -> (i32, i32, i32, i32) {
    %c0_i32 = arith.constant 0 : i32
    %c0_i32_0 = arith.constant 0 : i32
    %c0_i32_1 = arith.constant 0 : i32
    return %arg0, %arg1, %c0_i32, %c0_i32_0 : i32, i32, i32, i32
  }
  func.func @transform_6(%arg0: i32, %arg1: i32) -> (i32, i32, i32, i32) {
    %c0_i32 = arith.constant 0 : i32
    %c0_i32_0 = arith.constant 0 : i32
    %c0_i32_1 = arith.constant 0 : i32
    return %arg0, %arg1, %c0_i32, %c0_i32_0 : i32, i32, i32, i32
  }
}

</mosaic_0001>

<llo_original>
// kernel: codebook_forward.1
$region0: #{codebook_forward.1}
  #allocation0 [shape = 'u32[]', space=smem, size = 0x4, offset = 0x4, fixed_abs, tag = 'smem constant byte address 0x4 - core index']
  #allocation1 [shape = 'u32[72,128]{1,0:T(1,128)}', space=vmem, size = 0x9000, scoped, tag = 'internal scratch']
  %s0 = inlined_call_operand.vmem [shape: f32[2,4,256], index: 0, kind: input, shape index: {}]
  %s1 = inlined_call_operand.vmem [shape: f32[128,4], index: 1, kind: input, shape index: {}]
  %s2 = inlined_call_operand.vmem [shape: f32[4,128], index: 2, kind: input, shape index: {}]
  %s3 = inlined_call_operand.vmem [shape: f32[128,1], index: 3, kind: input, shape index: {}]
  %s4 = inlined_call_operand.vmem [shape: f32[2,4,256], index: 4, kind: output, shape index: {0}]
  %s5 = inlined_call_operand.vmem [shape: f32[2,1,128,1], index: 5, kind: output, shape index: {1}]
  %s6 = inlined_call_operand.vmem [shape: f32[2,1,1,1], index: 6, kind: output, shape index: {2}]
  %7 = xla_tuple %s4, %s5, %s6
  %s8 = sld [smem:[#allocation0]]
  $region65: #{codebook_forward.1} parent=0
    _
  %s10 = ssub.s32 1, %s8
  %s11 = scalar_select 0, %s10, %s8
  loop: start=0, step=1, limit=4
  $region2: #{codebook_forward.1} parent=0 // loop_pre_header
    _
  $region3: #{codebook_forward.1} parent=0 // loop_header
    %s13 = sphi 0, %s17
    %p14 = scmp.ge.s32.totalorder %s13, 4
    %s20 = sphi 0, %s32
    %s21 = sphi 0, %s28
    %s22 = sphi 0, %s20
    %s23 = sphi 0, %s21
    %s24 = sphi 0, %s22
    %s25 = sphi 0, %s23
    %s37 = sphi 0, %s39
    %s40 = sphi 0, %s37
    %s41 = sphi 0, %s40
    %s57 = sphi 0, %s41
    %s61 = sphi 0, %s61
    %s63 = sphi 0, %s61
    %s64 = sphi 0, %s63
    %s78 = sphi 0, %s64
    %s82 = sphi 0, %s82
    %s84 = sphi 0, %s82
    %s85 = sphi 0, %s84
    %s99 = sphi 0, %s85
    %s103 = sphi 0, %s103
    %s105 = sphi 0, %s103
    %s106 = sphi 0, %s105
    %s120 = sphi 0, %s106
    %s128 = sphi 0, %s130
    %s131 = sphi 0, %s128
    %s132 = sphi 0, %s131
    %s148 = sphi 0, %s132
    %s156 = sphi 0, %s158
    %s159 = sphi 0, %s156
    %s160 = sphi 0, %s159
    %s176 = sphi 0, %s160
    %s184 = sphi 0, %s186
    %s187 = sphi 0, %s184
    %s188 = sphi 0, %s187
    %s204 = sphi 0, %s188
  $region4: #{codebook_forward.1} parent=0 // loop_header_branch
    %16 = sbr.rel (%p14) target = $region8
  $region5: #{codebook_forward.1} parent=0 // loop_body
    %s18 = ssub.s32 %s13, 1
    %s19 = ssub.s32 %s13, 2
    %s26 = sadd.s32 1, %s21
    %p27 = scmp.ge.s32.totalorder %s26, 1
    %s28 = scalar_select %p27, 0, %s26
    %s29 = sadd.s32 1, %s20
    %s30 = scalar_select %p27, %s29, %s20
    %p31 = scmp.ge.s32.totalorder %s30, 2
    %s32 = scalar_select %p31, 0, %s30
    %s33 = ssub.s32 %s20, %s32
    %s34 = ssub.s32 %s21, %s28
    %s35 = sor.u32 %s33, %s34
    %p36 = scmp.eq.s32.totalorder %s35, 0
    %s38 = sadd.s32 %s37, 1
    %s39 = scalar_select %p36, %s37, %s38
    %p42 = pneg %p36
    %p43 = scmp.eq.s32.totalorder %s13, 1
    %p44 = por %p42, %p43
    %p45 = scmp.ne.s32.totalorder %s37, %s40
    %p46 = scmp.eq.s32.totalorder %s13, 0
    %p47 = por %p45, %p46
    %p48 = scmp.ne.s32.totalorder %s37, %s40
    %p49 = scmp.eq.s32.totalorder %s18, 1
    %p50 = por %p48, %p49
    %p51 = scmp.ne.s32.totalorder %s40, %s41
    %p52 = scmp.eq.s32.totalorder %s18, 0
    %p53 = por %p51, %p52
    %p54 = scmp.ne.s32.totalorder %s40, %s41
    %p55 = scmp.eq.s32.totalorder %s19, 1
    %p56 = por %p54, %p55
    %p58 = scmp.ne.s32.totalorder %s41, %s57
    %p59 = scmp.eq.s32.totalorder %s19, 0
    %p60 = por %p58, %p59
    %s62 = sadd.s32 %s61, 1
    %p65 = scmp.eq.s32.totalorder %s13, 1
    %p66 = scmp.ne.s32.totalorder %s61, %s63
    %p67 = scmp.eq.s32.totalorder %s13, 0
    %p68 = por %p66, %p67
    %p69 = scmp.ne.s32.totalorder %s61, %s63
    %p70 = scmp.eq.s32.totalorder %s18, 1
    %p71 = por %p69, %p70
    %p72 = scmp.ne.s32.totalorder %s63, %s64
    %p73 = scmp.eq.s32.totalorder %s18, 0
    %p74 = por %p72, %p73
    %p75 = scmp.ne.s32.totalorder %s63, %s64
    %p76 = scmp.eq.s32.totalorder %s19, 1
    %p77 = por %p75, %p76
    %p79 = scmp.ne.s32.totalorder %s64, %s78
    %p80 = scmp.eq.s32.totalorder %s19, 0
    %p81 = por %p79, %p80
    %s83 = sadd.s32 %s82, 1
    %p86 = scmp.eq.s32.totalorder %s13, 1
    %p87 = scmp.ne.s32.totalorder %s82, %s84
    %p88 = scmp.eq.s32.totalorder %s13, 0
    %p89 = por %p87, %p88
    %p90 = scmp.ne.s32.totalorder %s82, %s84
    %p91 = scmp.eq.s32.totalorder %s18, 1
    %p92 = por %p90, %p91
    %p93 = scmp.ne.s32.totalorder %s84, %s85
    %p94 = scmp.eq.s32.totalorder %s18, 0
    %p95 = por %p93, %p94
    %p96 = scmp.ne.s32.totalorder %s84, %s85
    %p97 = scmp.eq.s32.totalorder %s19, 1
    %p98 = por %p96, %p97
    %p100 = scmp.ne.s32.totalorder %s85, %s99
    %p101 = scmp.eq.s32.totalorder %s19, 0
    %p102 = por %p100, %p101
    %s104 = sadd.s32 %s103, 1
    %p107 = scmp.eq.s32.totalorder %s13, 1
    %p108 = scmp.ne.s32.totalorder %s103, %s105
    %p109 = scmp.eq.s32.totalorder %s13, 0
    %p110 = por %p108, %p109
    %p111 = scmp.ne.s32.totalorder %s103, %s105
    %p112 = scmp.eq.s32.totalorder %s18, 1
    %p113 = por %p111, %p112
    %p114 = scmp.ne.s32.totalorder %s105, %s106
    %p115 = scmp.eq.s32.totalorder %s18, 0
    %p116 = por %p114, %p115
    %p117 = scmp.ne.s32.totalorder %s105, %s106
    %p118 = scmp.eq.s32.totalorder %s19, 1
    %p119 = por %p117, %p118
    %p121 = scmp.ne.s32.totalorder %s106, %s120
    %p122 = scmp.eq.s32.totalorder %s19, 0
    %p123 = por %p121, %p122
    %s124 = ssub.s32 %s20, %s32
    %s125 = ssub.s32 %s21, %s28
    %s126 = sor.u32 %s124, %s125
    %p127 = scmp.eq.s32.totalorder %s126, 0
    %s129 = sadd.s32 %s128, 1
    %s130 = scalar_select %p127, %s128, %s129
    %p133 = pneg %p127
    %p134 = scmp.eq.s32.totalorder %s13, 1
    %p135 = por %p133, %p134
    %p136 = scmp.ne.s32.totalorder %s128, %s131
    %p137 = scmp.eq.s32.totalorder %s13, 0
    %p138 = por %p136, %p137
    %p139 = scmp.ne.s32.totalorder %s128, %s131
    %p140 = scmp.eq.s32.totalorder %s18, 1
    %p141 = por %p139, %p140
    %p142 = scmp.ne.s32.totalorder %s131, %s132
    %p143 = scmp.eq.s32.totalorder %s18, 0
    %p144 = por %p142, %p143
    %p145 = scmp.ne.s32.totalorder %s131, %s132
    %p146 = scmp.eq.s32.totalorder %s19, 1
    %p147 = por %p145, %p146
    %p149 = scmp.ne.s32.totalorder %s132, %s148
    %p150 = scmp.eq.s32.totalorder %s19, 0
    %p151 = por %p149, %p150
    %s152 = ssub.s32 %s20, %s32
    %s153 = ssub.s32 %s21, %s28
    %s154 = sor.u32 %s152, %s153
    %p155 = scmp.eq.s32.totalorder %s154, 0
    %s157 = sadd.s32 %s156, 1
    %s158 = scalar_select %p155, %s156, %s157
    %p161 = pneg %p155
    %p162 = scmp.eq.s32.totalorder %s13, 1
    %p163 = por %p161, %p162
    %p164 = scmp.ne.s32.totalorder %s156, %s159
    %p165 = scmp.eq.s32.totalorder %s13, 0
    %p166 = por %p164, %p165
    %p167 = scmp.ne.s32.totalorder %s156, %s159
    %p168 = scmp.eq.s32.totalorder %s18, 1
    %p169 = por %p167, %p168
    %p170 = scmp.ne.s32.totalorder %s159, %s160
    %p171 = scmp.eq.s32.totalorder %s18, 0
    %p172 = por %p170, %p171
    %p173 = scmp.ne.s32.totalorder %s159, %s160
    %p174 = scmp.eq.s32.totalorder %s19, 1
    %p175 = por %p173, %p174
    %p177 = scmp.ne.s32.totalorder %s160, %s176
    %p178 = scmp.eq.s32.totalorder %s19, 0
    %p179 = por %p177, %p178
    %s180 = ssub.s32 %s20, %s32
    %s181 = ssub.s32 %s21, %s28
    %s182 = sor.u32 %s180, %s181
    %p183 = scmp.eq.s32.totalorder %s182, 0
    %s185 = sadd.s32 %s184, 1
    %s186 = scalar_select %p183, %s184, %s185
    %p189 = pneg %p183
    %p190 = scmp.eq.s32.totalorder %s13, 1
    %p191 = por %p189, %p190
    %p192 = scmp.ne.s32.totalorder %s184, %s187
    %p193 = scmp.eq.s32.totalorder %s13, 0
    %p194 = por %p192, %p193
    %p195 = scmp.ne.s32.totalorder %s184, %s187
    %p196 = scmp.eq.s32.totalorder %s18, 1
    %p197 = por %p195, %p196
    %p198 = scmp.ne.s32.totalorder %s187, %s188
    %p199 = scmp.eq.s32.totalorder %s18, 0
    %p200 = por %p198, %p199
    %p201 = scmp.ne.s32.totalorder %s187, %s188
    %p202 = scmp.eq.s32.totalorder %s19, 1
    %p203 = por %p201, %p202
    %p205 = scmp.ne.s32.totalorder %s188, %s204
    %p206 = scmp.eq.s32.totalorder %s19, 0
    %p207 = por %p205, %p206
    %p208 = scmp.le.s32.totalorder 1, %s13
    %p209 = scmp.lt.s32.totalorder %s13, 3
    %p210 = pnand %p208, %p209
    %p211 = pneg %p210
    // Predicated region
    $region9: #{codebook_forward.1} parent=5 // pred_check
      _
    $region10: #{codebook_forward.1} parent=5 // pred_check_branch
      %213 = sbr.rel (%p210) target = $region12
    $region11: #{codebook_forward.1} parent=5 // pred_region
      %s214 = ssub.s32 %s13, 1
      // Predicated region
      $region13: #{codebook_forward.1} parent=11 // pred_check
        %p215 = pneg %p74
      $region14: #{codebook_forward.1} parent=11 // pred_check_branch
        %217 = sbr.rel (%p215) target = $region16
      $region15: #{codebook_forward.1} parent=11 // pred_region
        _
      $region16: #{codebook_forward.1} parent=11 // pred_fallthru
        _
      // Predicated region
      $region17: #{codebook_forward.1} parent=11 // pred_check
        %p218 = pneg %p95
      $region18: #{codebook_forward.1} parent=11 // pred_check_branch
        %220 = sbr.rel (%p218) target = $region20
      $region19: #{codebook_forward.1} parent=11 // pred_region
        _
      $region20: #{codebook_forward.1} parent=11 // pred_fallthru
        _
      // Predicated region
      $region21: #{codebook_forward.1} parent=11 // pred_check
        %p221 = pneg %p116
      $region22: #{codebook_forward.1} parent=11 // pred_check_branch
        %223 = sbr.rel (%p221) target = $region24
      $region23: #{codebook_forward.1} parent=11 // pred_region
        _
      $region24: #{codebook_forward.1} parent=11 // pred_fallthru
        _
    $region12: #{codebook_forward.1} parent=5 // pred_fallthru
      _
    %p224 = scmp.lt.s32.totalorder %s13, 2
    // Predicated region
    $region25: #{codebook_forward.1} parent=5 // pred_check
      %p225 = pneg %p224
    $region26: #{codebook_forward.1} parent=5 // pred_check_branch
      %227 = sbr.rel (%p225) target = $region28
    $region27: #{codebook_forward.1} parent=5 // pred_region
      // Predicated region
      $region29: #{codebook_forward.1} parent=27 // pred_check
        %p228 = pneg %p47
      $region30: #{codebook_forward.1} parent=27 // pred_check_branch
        %230 = sbr.rel (%p228) target = $region32
      $region31: #{codebook_forward.1} parent=27 // pred_region
        %s231 = smul.u32 2, %s21
        %p232 = scmp.lt.s32.totalorder %s20, 1
        %s233 = scalar_select %p232, %s20, 1
        %p234 = scmp.lt.s32.totalorder %s231, 1
        %s235 = scalar_select %p234, %s231, 1
        %s236 = smul.addr %s233, 2
        %s237 = sadd.s32 %s235, %s236
        %s238 = smul.addr %s237, 4
        %s239 = scalar_lea.vmem %s0, %s238
        %s240 = smul.u32 2, %s21
      $region32: #{codebook_forward.1} parent=27 // pred_fallthru
        _
    $region28: #{codebook_forward.1} parent=5 // pred_fallthru
      _
    %p241 = scmp.le.s32.totalorder 1, %s13
    %p242 = scmp.lt.s32.totalorder %s13, 3
    %p243 = pnand %p241, %p242
    %p244 = pneg %p243
    // Predicated region
    $region33: #{codebook_forward.1} parent=5 // pred_check
      _
    $region34: #{codebook_forward.1} parent=5 // pred_check_branch
      %246 = sbr.rel (%p243) target = $region36
    $region35: #{codebook_forward.1} parent=5 // pred_region
      %s247 = ssub.s32 %s13, 1
      %s248 = smul.u32 2, %s23
      %p249 = scmp.lt.s32.totalorder %s22, 1
      %s250 = scalar_select %p249, %s22, 1
      %p251 = scmp.lt.s32.totalorder %s248, 1
      %s252 = scalar_select %p251, %s248, 1
      %s253 = smul.addr %s250, 2
      %s254 = sadd.s32 %s252, %s253
      %s255 = smul.addr %s254, 4
      %s256 = scalar_lea.vmem %s0, %s255
      %p257 = pneg %p53
      %p258 = pneg %p50
      %p259 = pneg %p74
      %p260 = pneg %p71
      %p261 = pneg %p95
      %p262 = pneg %p92
      %p263 = pneg %p116
      %p264 = pneg %p113
      %p265 = pneg %p144
      %p266 = pneg %p141
      %s267 = smul.u32 2, %s23
      %p268 = scmp.lt.s32.totalorder %s22, 1
      %s269 = scalar_select %p268, %s22, 1
      %p270 = scmp.lt.s32.totalorder %s267, 1
      %s271 = scalar_select %p270, %s267, 1
      %s272 = smul.addr %s269, 2
      %s273 = sadd.s32 %s271, %s272
      %s274 = smul.addr %s273, 4
      %s275 = scalar_lea.vmem %s4, %s274
      %p276 = pneg %p172
      %p277 = pneg %p169
      %p278 = scmp.lt.s32.totalorder %s22, 1
      %s279 = scalar_select %p278, %s22, 1
      %p280 = scmp.lt.s32.totalorder %s23, 0
      %s281 = scalar_select %p280, %s23, 0
      %s282 = smul.addr %s281, 16
      %s283 = smul.addr %s279, 16
      %s284 = sadd.s32 %s282, %s283
      %s285 = smul.addr %s284, 8
      %s286 = scalar_lea.vmem %s5, %s285
      %p287 = pneg %p200
      %p288 = pneg %p197
      %p289 = scmp.lt.s32.totalorder %s22, 1
      %s290 = scalar_select %p289, %s22, 1
      %p291 = scmp.lt.s32.totalorder %s23, 0
      %s292 = scalar_select %p291, %s23, 0
      %s293 = sadd.s32 %s292, %s290
      %s294 = scalar_lea.vmem %s6, %s293
      %s295 = smul.u32 2, %s23
      %p296 = scmp.lt.s32.totalorder %s22, 1
      %s297 = scalar_select %p296, %s22, 1
      %p298 = scmp.lt.s32.totalorder %s295, 1
      %s299 = scalar_select %p298, %s295, 1
      %s300 = smul.addr %s297, 2
      %s301 = sadd.s32 %s299, %s300
      %s302 = smul.addr %s301, 4
      %s303 = scalar_lea.vmem %s0, %s302
      %s304 = smul.u32 2, %s23
      %s305 = smul.u32 2, %s23
      %p306 = scmp.lt.s32.totalorder %s22, 1
      %s307 = scalar_select %p306, %s22, 1
      %p308 = scmp.lt.s32.totalorder %s305, 1
      %s309 = scalar_select %p308, %s305, 1
      %s310 = smul.addr %s307, 2
      %s311 = sadd.s32 %s309, %s310
      %s312 = smul.addr %s311, 4
      %s313 = scalar_lea.vmem %s4, %s312
      %s314 = smul.u32 2, %s23
      %p315 = scmp.lt.s32.totalorder %s22, 1
      %s316 = scalar_select %p315, %s22, 1
      %p317 = scmp.lt.s32.totalorder %s23, 0
      %s318 = scalar_select %p317, %s23, 0
      %s319 = smul.addr %s318, 16
      %s320 = smul.addr %s316, 16
      %s321 = sadd.s32 %s319, %s320
      %s322 = smul.addr %s321, 8
      %s323 = scalar_lea.vmem %s5, %s322
      %p324 = scmp.lt.s32.totalorder %s22, 1
      %s325 = scalar_select %p324, %s22, 1
      %p326 = scmp.lt.s32.totalorder %s23, 0
      %s327 = scalar_select %p326, %s23, 0
      %s328 = sadd.s32 %s327, %s325
      %s329 = scalar_lea.vmem %s6, %s328
      %v330 = vld [vmem:[%s303] sm:$0xff]
      %v331 = vld [vmem:[%s1] sm:$0xff]
      %v332 = vld [vmem:[%s1 + $0x8] sm:$0xff]
      %v333 = vld [vmem:[%s1 + $0x10] sm:$0xff]
      %v334 = vld [vmem:[%s1 + $0x18] sm:$0xff]
      %v335 = vld [vmem:[%s1 + $0x20] sm:$0xff]
      %v336 = vld [vmem:[%s1 + $0x28] sm:$0xff]
      %v337 = vld [vmem:[%s1 + $0x30] sm:$0xff]
      %v338 = vld [vmem:[%s1 + $0x38] sm:$0xff]
      %v339 = vld [vmem:[%s1 + $0x40] sm:$0xff]
      %v340 = vld [vmem:[%s1 + $0x48] sm:$0xff]
      %v341 = vld [vmem:[%s1 + $0x50] sm:$0xff]
      %v342 = vld [vmem:[%s1 + $0x58] sm:$0xff]
      %v343 = vld [vmem:[%s1 + $0x60] sm:$0xff]
      %v344 = vld [vmem:[%s1 + $0x68] sm:$0xff]
      %v345 = vld [vmem:[%s1 + $0x70] sm:$0xff]
      %v346 = vld [vmem:[%s1 + $0x78] sm:$0xff]
      %v347 = vld [vmem:[%s2] sm:$0xf]
      %v348 = vld [vmem:[%s3] sm:$0xff]
      %v349 = vld [vmem:[%s3 + $0x8] sm:$0xff]
      %v350 = vld [vmem:[%s3 + $0x10] sm:$0xff]
      %v351 = vld [vmem:[%s3 + $0x18] sm:$0xff]
      %v352 = vld [vmem:[%s3 + $0x20] sm:$0xff]
      %v353 = vld [vmem:[%s3 + $0x28] sm:$0xff]
      %v354 = vld [vmem:[%s3 + $0x30] sm:$0xff]
      %v355 = vld [vmem:[%s3 + $0x38] sm:$0xff]
      %v356 = vld [vmem:[%s3 + $0x40] sm:$0xff]
      %v357 = vld [vmem:[%s3 + $0x48] sm:$0xff]
      %v358 = vld [vmem:[%s3 + $0x50] sm:$0xff]
      %v359 = vld [vmem:[%s3 + $0x58] sm:$0xff]
      %v360 = vld [vmem:[%s3 + $0x60] sm:$0xff]
      %v361 = vld [vmem:[%s3 + $0x68] sm:$0xff]
      %v362 = vld [vmem:[%s3 + $0x70] sm:$0xff]
      %v363 = vld [vmem:[%s3 + $0x78] sm:$0xff]
      %365 = vst [vmem:[#allocation1] ss:$2 sm:$0xff] %v330
      %v366 = vld.sshfl [vmem:[#allocation1] sm:$0xff pattern:$0x75316420]
      %v367 = vld.sshfl [vmem:[#allocation1 + $0x8] sm:$0xff pattern:$0x75316420]
      %vm368 = vcmask 31744
      %v370 = vsel %vm368, %v331, 0
      %v373 = vsel %vm368, %v332, 0
      %v376 = vsel %vm368, %v333, 0
      %v379 = vsel %vm368, %v334, 0
      %v382 = vsel %vm368, %v335, 0
      %v385 = vsel %vm368, %v336, 0
      %v388 = vsel %vm368, %v337, 0
      %v391 = vsel %vm368, %v338, 0
      %v394 = vsel %vm368, %v339, 0
      %v397 = vsel %vm368, %v340, 0
      %v400 = vsel %vm368, %v341, 0
      %v403 = vsel %vm368, %v342, 0
      %v406 = vsel %vm368, %v343, 0
      %v409 = vsel %vm368, %v344, 0
      %v412 = vsel %vm368, %v345, 0
      %v415 = vsel %vm368, %v346, 0
      %vm417 = vcmask 1043456
      %v418 = vsel %vm417, %v366, 0
      %v420 = vsel %vm417, %v367, 0
      %422 = vmatpush.msra.mxu0 0.0
      %423 = vmatpush.msra.mxu0 0.0
      %424 = vmatpush.msra.mxu0 0.0
      %425 = vmatpush.msra.mxu0 0.0
      %426 = vmatpush.msra.mxu0 0.0
      %427 = vmatpush.msra.mxu0 0.0
      %428 = vmatpush.msra.mxu0 0.0
      %429 = vmatpush.msra.mxu0 0.0
      %430 = vmatpush.msra.mxu0 0.0
      %431 = vmatpush.msra.mxu0 0.0
      %432 = vmatpush.msra.mxu0 0.0
      %433 = vmatpush.msra.mxu0 0.0
      %434 = vmatpush.msra.mxu0 0.0
      %435 = vmatpush.msra.mxu0 0.0
      %436 = vmatpush.msra.mxu0 0.0
      %437 = vmatpush.msra.mxu0 %v418
      %438 = vmatmul.f32.gmra.mxu0 %v370
      %v439 = vpop.f32.mrf.mxu0
      %v440 = vadd.f32 0.0, %v439
      %441 = vmatmul.f32.gmra.mxu0 %v373
      %v442 = vpop.f32.mrf.mxu0
      %v443 = vadd.f32 0.0, %v442
      %444 = vmatmul.f32.gmra.mxu0 %v376
      %v445 = vpop.f32.mrf.mxu0
      %v446 = vadd.f32 0.0, %v445
      %447 = vmatmul.f32.gmra.mxu0 %v379
      %v448 = vpop.f32.mrf.mxu0
      %v449 = vadd.f32 0.0, %v448
      %450 = vmatmul.f32.gmra.mxu0 %v382
      %v451 = vpop.f32.mrf.mxu0
      %v452 = vadd.f32 0.0, %v451
      %453 = vmatmul.f32.gmra.mxu0 %v385
      %v454 = vpop.f32.mrf.mxu0
      %v455 = vadd.f32 0.0, %v454
      %456 = vmatmul.f32.gmra.mxu0 %v388
      %v457 = vpop.f32.mrf.mxu0
      %v458 = vadd.f32 0.0, %v457
      %459 = vmatmul.f32.gmra.mxu0 %v391
      %v460 = vpop.f32.mrf.mxu0
      %v461 = vadd.f32 0.0, %v460
      %462 = vmatmul.f32.gmra.mxu0 %v394
      %v463 = vpop.f32.mrf.mxu0
      %v464 = vadd.f32 0.0, %v463
      %465 = vmatmul.f32.gmra.mxu0 %v397
      %v466 = vpop.f32.mrf.mxu0
      %v467 = vadd.f32 0.0, %v466
      %468 = vmatmul.f32.gmra.mxu0 %v400
      %v469 = vpop.f32.mrf.mxu0
      %v470 = vadd.f32 0.0, %v469
      %471 = vmatmul.f32.gmra.mxu0 %v403
      %v472 = vpop.f32.mrf.mxu0
      %v473 = vadd.f32 0.0, %v472
      %474 = vmatmul.f32.gmra.mxu0 %v406
      %v475 = vpop.f32.mrf.mxu0
      %v476 = vadd.f32 0.0, %v475
      %477 = vmatmul.f32.gmra.mxu0 %v409
      %v478 = vpop.f32.mrf.mxu0
      %v479 = vadd.f32 0.0, %v478
      %480 = vmatmul.f32.gmra.mxu0 %v412
      %v481 = vpop.f32.mrf.mxu0
      %v482 = vadd.f32 0.0, %v481
      %483 = vmatmul.f32.gmra.mxu0 %v415
      %v484 = vpop.f32.mrf.mxu0
      %v485 = vadd.f32 0.0, %v484
      %486 = vdwg.mxu0
      %487 = vmatpush.msra.mxu0 0.0
      %488 = vmatpush.msra.mxu0 0.0
      %489 = vmatpush.msra.mxu0 0.0
      %490 = vmatpush.msra.mxu0 0.0
      %491 = vmatpush.msra.mxu0 0.0
      %492 = vmatpush.msra.mxu0 0.0
      %493 = vmatpush.msra.mxu0 0.0
      %494 = vmatpush.msra.mxu0 0.0
      %495 = vmatpush.msra.mxu0 0.0
      %496 = vmatpush.msra.mxu0 0.0
      %497 = vmatpush.msra.mxu0 0.0
      %498 = vmatpush.msra.mxu0 0.0
      %499 = vmatpush.msra.mxu0 0.0
      %500 = vmatpush.msra.mxu0 0.0
      %501 = vmatpush.msra.mxu0 0.0
      %502 = vmatpush.msra.mxu0 %v420
      %503 = vmatmul.f32.gmra.mxu0 %v370
      %v504 = vpop.f32.mrf.mxu0
      %v505 = vadd.f32 0.0, %v504
      %506 = vmatmul.f32.gmra.mxu0 %v373
      %v507 = vpop.f32.mrf.mxu0
      %v508 = vadd.f32 0.0, %v507
      %509 = vmatmul.f32.gmra.mxu0 %v376
      %v510 = vpop.f32.mrf.mxu0
      %v511 = vadd.f32 0.0, %v510
      %512 = vmatmul.f32.gmra.mxu0 %v379
      %v513 = vpop.f32.mrf.mxu0
      %v514 = vadd.f32 0.0, %v513
      %515 = vmatmul.f32.gmra.mxu0 %v382
      %v516 = vpop.f32.mrf.mxu0
      %v517 = vadd.f32 0.0, %v516
      %518 = vmatmul.f32.gmra.mxu0 %v385
      %v519 = vpop.f32.mrf.mxu0
      %v520 = vadd.f32 0.0, %v519
      %521 = vmatmul.f32.gmra.mxu0 %v388
      %v522 = vpop.f32.mrf.mxu0
      %v523 = vadd.f32 0.0, %v522
      %524 = vmatmul.f32.gmra.mxu0 %v391
      %v525 = vpop.f32.mrf.mxu0
      %v526 = vadd.f32 0.0, %v525
      %527 = vmatmul.f32.gmra.mxu0 %v394
      %v528 = vpop.f32.mrf.mxu0
      %v529 = vadd.f32 0.0, %v528
      %530 = vmatmul.f32.gmra.mxu0 %v397
      %v531 = vpop.f32.mrf.mxu0
      %v532 = vadd.f32 0.0, %v531
      %533 = vmatmul.f32.gmra.mxu0 %v400
      %v534 = vpop.f32.mrf.mxu0
      %v535 = vadd.f32 0.0, %v534
      %536 = vmatmul.f32.gmra.mxu0 %v403
      %v537 = vpop.f32.mrf.mxu0
      %v538 = vadd.f32 0.0, %v537
      %539 = vmatmul.f32.gmra.mxu0 %v406
      %v540 = vpop.f32.mrf.mxu0
      %v541 = vadd.f32 0.0, %v540
      %542 = vmatmul.f32.gmra.mxu0 %v409
      %v543 = vpop.f32.mrf.mxu0
      %v544 = vadd.f32 0.0, %v543
      %545 = vmatmul.f32.gmra.mxu0 %v412
      %v546 = vpop.f32.mrf.mxu0
      %v547 = vadd.f32 0.0, %v546
      %548 = vmatmul.f32.gmra.mxu0 %v415
      %v549 = vpop.f32.mrf.mxu0
      %v550 = vadd.f32 0.0, %v549
      %551 = vdwg.mxu0
      %v552 = vmul.f32 %v440, 2.0
      %v553 = vmul.f32 %v505, 2.0
      %v554 = vmul.f32 %v443, 2.0
      %v555 = vmul.f32 %v508, 2.0
      %v556 = vmul.f32 %v446, 2.0
      %v557 = vmul.f32 %v511, 2.0
      %v558 = vmul.f32 %v449, 2.0
      %v559 = vmul.f32 %v514, 2.0
      %v560 = vmul.f32 %v452, 2.0
      %v561 = vmul.f32 %v517, 2.0
      %v562 = vmul.f32 %v455, 2.0
      %v563 = vmul.f32 %v520, 2.0
      %v564 = vmul.f32 %v458, 2.0
      %v565 = vmul.f32 %v523, 2.0
      %v566 = vmul.f32 %v461, 2.0
      %v567 = vmul.f32 %v526, 2.0
      %v568 = vmul.f32 %v464, 2.0
      %v569 = vmul.f32 %v529, 2.0
      %v570 = vmul.f32 %v467, 2.0
      %v571 = vmul.f32 %v532, 2.0
      %v572 = vmul.f32 %v470, 2.0
      %v573 = vmul.f32 %v535, 2.0
      %v574 = vmul.f32 %v473, 2.0
      %v575 = vmul.f32 %v538, 2.0
      %v576 = vmul.f32 %v476, 2.0
      %v577 = vmul.f32 %v541, 2.0
      %v578 = vmul.f32 %v479, 2.0
      %v579 = vmul.f32 %v544, 2.0
      %v580 = vmul.f32 %v482, 2.0
      %v581 = vmul.f32 %v547, 2.0
      %v582 = vmul.f32 %v485, 2.0
      %v583 = vmul.f32 %v550, 2.0
      %585 = vset.pattern.permute.xlu0 0
      %586 = vperm.xlu0 %585, %v348
      %v587 = vpop.permute.xlu0 %586
      %590 = vset.pattern.permute.xlu0 0
      %591 = vperm.xlu0 %590, %v349
      %v592 = vpop.permute.xlu0 %591
      %595 = vset.pattern.permute.xlu0 0
      %596 = vperm.xlu0 %595, %v350
      %v597 = vpop.permute.xlu0 %596
      %600 = vset.pattern.permute.xlu0 0
      %601 = vperm.xlu0 %600, %v351
      %v602 = vpop.permute.xlu0 %601
      %605 = vset.pattern.permute.xlu0 0
      %606 = vperm.xlu0 %605, %v352
      %v607 = vpop.permute.xlu0 %606
      %610 = vset.pattern.permute.xlu0 0
      %611 = vperm.xlu0 %610, %v353
      %v612 = vpop.permute.xlu0 %611
      %615 = vset.pattern.permute.xlu0 0
      %616 = vperm.xlu0 %615, %v354
      %v617 = vpop.permute.xlu0 %616
      %620 = vset.pattern.permute.xlu0 0
      %621 = vperm.xlu0 %620, %v355
      %v622 = vpop.permute.xlu0 %621
      %625 = vset.pattern.permute.xlu0 0
      %626 = vperm.xlu0 %625, %v356
      %v627 = vpop.permute.xlu0 %626
      %630 = vset.pattern.permute.xlu0 0
      %631 = vperm.xlu0 %630, %v357
      %v632 = vpop.permute.xlu0 %631
      %635 = vset.pattern.permute.xlu0 0
      %636 = vperm.xlu0 %635, %v358
      %v637 = vpop.permute.xlu0 %636
      %640 = vset.pattern.permute.xlu0 0
      %641 = vperm.xlu0 %640, %v359
      %v642 = vpop.permute.xlu0 %641
      %645 = vset.pattern.permute.xlu0 0
      %646 = vperm.xlu0 %645, %v360
      %v647 = vpop.permute.xlu0 %646
      %650 = vset.pattern.permute.xlu0 0
      %651 = vperm.xlu0 %650, %v361
      %v652 = vpop.permute.xlu0 %651
      %655 = vset.pattern.permute.xlu0 0
      %656 = vperm.xlu0 %655, %v362
      %v657 = vpop.permute.xlu0 %656
      %660 = vset.pattern.permute.xlu0 0
      %661 = vperm.xlu0 %660, %v363
      %v662 = vpop.permute.xlu0 %661
      %v664 = vsub.f32 %v587, %v552
      %v665 = vsub.f32 %v587, %v553
      %v666 = vsub.f32 %v592, %v554
      %v667 = vsub.f32 %v592, %v555
      %v668 = vsub.f32 %v597, %v556
      %v669 = vsub.f32 %v597, %v557
      %v670 = vsub.f32 %v602, %v558
      %v671 = vsub.f32 %v602, %v559
      %v672 = vsub.f32 %v607, %v560
      %v673 = vsub.f32 %v607, %v561
      %v674 = vsub.f32 %v612, %v562
      %v675 = vsub.f32 %v612, %v563
      %v676 = vsub.f32 %v617, %v564
      %v677 = vsub.f32 %v617, %v565
      %v678 = vsub.f32 %v622, %v566
      %v679 = vsub.f32 %v622, %v567
      %v680 = vsub.f32 %v627, %v568
      %v681 = vsub.f32 %v627, %v569
      %v682 = vsub.f32 %v632, %v570
      %v683 = vsub.f32 %v632, %v571
      %v684 = vsub.f32 %v637, %v572
      %v685 = vsub.f32 %v637, %v573
      %v686 = vsub.f32 %v642, %v574
      %v687 = vsub.f32 %v642, %v575
      %v688 = vsub.f32 %v647, %v576
      %v689 = vsub.f32 %v647, %v577
      %v690 = vsub.f32 %v652, %v578
      %v691 = vsub.f32 %v652, %v579
      %v692 = vsub.f32 %v657, %v580
      %v693 = vsub.f32 %v657, %v581
      %v694 = vsub.f32 %v662, %v582
      %v695 = vsub.f32 %v662, %v583
      %v696 = vmin.f32 %v664, %v668
      %v697 = vmin.f32 %v666, %v670
      %v698 = vmin.f32 %v696, %v672
      %v699 = vmin.f32 %v697, %v674
      %v700 = vmin.f32 %v698, %v676
      %v701 = vmin.f32 %v699, %v678
      %v702 = vmin.f32 %v700, %v680
      %v703 = vmin.f32 %v701, %v682
      %v704 = vmin.f32 %v702, %v684
      %v705 = vmin.f32 %v703, %v686
      %v706 = vmin.f32 %v704, %v688
      %v707 = vmin.f32 %v705, %v690
      %v708 = vmin.f32 %v706, %v692
      %v709 = vmin.f32 %v707, %v694
      %v710 = vmin.f32 %v708, %v709
      %v711 = vrot.slane %v710, 4
      %v712 = vmin.f32 %v710, %v711
      %v713 = vrot.slane %v712, 2
      %v714 = vmin.f32 %v712, %v713
      %v715 = vrot.slane %v714, 1
      %v716 = vmin.f32 %v714, %v715
      %v717 = vmin.f32 %v665, %v669
      %v718 = vmin.f32 %v667, %v671
      %v719 = vmin.f32 %v717, %v673
      %v720 = vmin.f32 %v718, %v675
      %v721 = vmin.f32 %v719, %v677
      %v722 = vmin.f32 %v720, %v679
      %v723 = vmin.f32 %v721, %v681
      %v724 = vmin.f32 %v722, %v683
      %v725 = vmin.f32 %v723, %v685
      %v726 = vmin.f32 %v724, %v687
      %v727 = vmin.f32 %v725, %v689
      %v728 = vmin.f32 %v726, %v691
      %v729 = vmin.f32 %v727, %v693
      %v730 = vmin.f32 %v728, %v695
      %v731 = vmin.f32 %v729, %v730
      %v732 = vrot.slane %v731, 4
      %v733 = vmin.f32 %v731, %v732
      %v734 = vrot.slane %v733, 2
      %v735 = vmin.f32 %v733, %v734
      %v736 = vrot.slane %v735, 1
      %v737 = vmin.f32 %v735, %v736
      %v738 = vlaneseq
      %v739 = vshrl.u32 %v738, 7
      %v740 = vadd.s32 %v739, 8
      %v741 = vadd.s32 %v739, 16
      %v742 = vadd.s32 %v739, 24
      %v743 = vadd.s32 %v739, 32
      %v744 = vadd.s32 %v739, 40
      %v745 = vadd.s32 %v739, 48
      %v746 = vadd.s32 %v739, 56
      %v747 = vadd.s32 %v739, 64
      %v748 = vadd.s32 %v739, 72
      %v749 = vadd.s32 %v739, 80
      %v750 = vadd.s32 %v739, 88
      %v751 = vadd.s32 %v739, 96
      %v752 = vadd.s32 %v739, 104
      %v753 = vadd.s32 %v739, 112
      %v754 = vadd.s32 %v739, 120
      %v755 = vcvt.s32.f32 %v739
      %v756 = vcvt.s32.f32 %v740
      %v757 = vcvt.s32.f32 %v741
      %v758 = vcvt.s32.f32 %v742
      %v759 = vcvt.s32.f32 %v743
      %v760 = vcvt.s32.f32 %v744
      %v761 = vcvt.s32.f32 %v745
      %v762 = vcvt.s32.f32 %v746
      %v763 = vcvt.s32.f32 %v747
      %v764 = vcvt.s32.f32 %v748
      %v765 = vcvt.s32.f32 %v749
      %v766 = vcvt.s32.f32 %v750
      %v767 = vcvt.s32.f32 %v751
      %v768 = vcvt.s32.f32 %v752
      %v769 = vcvt.s32.f32 %v753
      %v770 = vcvt.s32.f32 %v754
      %vm771 = vcmp.eq.f32.partialorder %v664, %v716
      %vm772 = vcmp.eq.f32.partialorder %v665, %v737
      %vm773 = vcmp.eq.f32.partialorder %v666, %v716
      %vm774 = vcmp.eq.f32.partialorder %v667, %v737
      %vm775 = vcmp.eq.f32.partialorder %v668, %v716
      %vm776 = vcmp.eq.f32.partialorder %v669, %v737
      %vm777 = vcmp.eq.f32.partialorder %v670, %v716
      %vm778 = vcmp.eq.f32.partialorder %v671, %v737
      %vm779 = vcmp.eq.f32.partialorder %v672, %v716
      %vm780 = vcmp.eq.f32.partialorder %v673, %v737
      %vm781 = vcmp.eq.f32.partialorder %v674, %v716
      %vm782 = vcmp.eq.f32.partialorder %v675, %v737
      %vm783 = vcmp.eq.f32.partialorder %v676, %v716
      %vm784 = vcmp.eq.f32.partialorder %v677, %v737
      %vm785 = vcmp.eq.f32.partialorder %v678, %v716
      %vm786 = vcmp.eq.f32.partialorder %v679, %v737
      %vm787 = vcmp.eq.f32.partialorder %v680, %v716
      %vm788 = vcmp.eq.f32.partialorder %v681, %v737
      %vm789 = vcmp.eq.f32.partialorder %v682, %v716
      %vm790 = vcmp.eq.f32.partialorder %v683, %v737
      %vm791 = vcmp.eq.f32.partialorder %v684, %v716
      %vm792 = vcmp.eq.f32.partialorder %v685, %v737
      %vm793 = vcmp.eq.f32.partialorder %v686, %v716
      %vm794 = vcmp.eq.f32.partialorder %v687, %v737
      %vm795 = vcmp.eq.f32.partialorder %v688, %v716
      %vm796 = vcmp.eq.f32.partialorder %v689, %v737
      %vm797 = vcmp.eq.f32.partialorder %v690, %v716
      %vm798 = vcmp.eq.f32.partialorder %v691, %v737
      %vm799 = vcmp.eq.f32.partialorder %v692, %v716
      %vm800 = vcmp.eq.f32.partialorder %v693, %v737
      %vm801 = vcmp.eq.f32.partialorder %v694, %v716
      %vm802 = vcmp.eq.f32.partialorder %v695, %v737
      %v803 = vsel %vm771, %v755, 128.0
      %v804 = vsel %vm772, %v755, 128.0
      %v805 = vsel %vm773, %v756, 128.0
      %v806 = vsel %vm774, %v756, 128.0
      %v807 = vsel %vm775, %v757, 128.0
      %v808 = vsel %vm776, %v757, 128.0
      %v809 = vsel %vm777, %v758, 128.0
      %v810 = vsel %vm778, %v758, 128.0
      %v811 = vsel %vm779, %v759, 128.0
      %v812 = vsel %vm780, %v759, 128.0
      %v813 = vsel %vm781, %v760, 128.0
      %v814 = vsel %vm782, %v760, 128.0
      %v815 = vsel %vm783, %v761, 128.0
      %v816 = vsel %vm784, %v761, 128.0
      %v817 = vsel %vm785, %v762, 128.0
      %v818 = vsel %vm786, %v762, 128.0
      %v819 = vsel %vm787, %v763, 128.0
      %v820 = vsel %vm788, %v763, 128.0
      %v821 = vsel %vm789, %v764, 128.0
      %v822 = vsel %vm790, %v764, 128.0
      %v823 = vsel %vm791, %v765, 128.0
      %v824 = vsel %vm792, %v765, 128.0
      %v825 = vsel %vm793, %v766, 128.0
      %v826 = vsel %vm794, %v766, 128.0
      %v827 = vsel %vm795, %v767, 128.0
      %v828 = vsel %vm796, %v767, 128.0
      %v829 = vsel %vm797, %v768, 128.0
      %v830 = vsel %vm798, %v768, 128.0
      %v831 = vsel %vm799, %v769, 128.0
      %v832 = vsel %vm800, %v769, 128.0
      %v833 = vsel %vm801, %v770, 128.0
      %v834 = vsel %vm802, %v770, 128.0
      %v835 = vmin.f32 %v803, %v807
      %v836 = vmin.f32 %v805, %v809
      %v837 = vmin.f32 %v835, %v811
      %v838 = vmin.f32 %v836, %v813
      %v839 = vmin.f32 %v837, %v815
      %v840 = vmin.f32 %v838, %v817
      %v841 = vmin.f32 %v839, %v819
      %v842 = vmin.f32 %v840, %v821
      %v843 = vmin.f32 %v841, %v823
      %v844 = vmin.f32 %v842, %v825
      %v845 = vmin.f32 %v843, %v827
      %v846 = vmin.f32 %v844, %v829
      %v847 = vmin.f32 %v845, %v831
      %v848 = vmin.f32 %v846, %v833
      %v849 = vmin.f32 %v847, %v848
      %v850 = vrot.slane %v849, 4
      %v851 = vmin.f32 %v849, %v850
      %v852 = vrot.slane %v851, 2
      %v853 = vmin.f32 %v851, %v852
      %v854 = vrot.slane %v853, 1
      %v855 = vmin.f32 %v853, %v854
      %v856 = vmin.f32 %v804, %v808
      %v857 = vmin.f32 %v806, %v810
      %v858 = vmin.f32 %v856, %v812
      %v859 = vmin.f32 %v857, %v814
      %v860 = vmin.f32 %v858, %v816
      %v861 = vmin.f32 %v859, %v818
      %v862 = vmin.f32 %v860, %v820
      %v863 = vmin.f32 %v861, %v822
      %v864 = vmin.f32 %v862, %v824
      %v865 = vmin.f32 %v863, %v826
      %v866 = vmin.f32 %v864, %v828
      %v867 = vmin.f32 %v865, %v830
      %v868 = vmin.f32 %v866, %v832
      %v869 = vmin.f32 %v867, %v834
      %v870 = vmin.f32 %v868, %v869
      %v871 = vrot.slane %v870, 4
      %v872 = vmin.f32 %v870, %v871
      %v873 = vrot.slane %v872, 2
      %v874 = vmin.f32 %v872, %v873
      %v875 = vrot.slane %v874, 1
      %v876 = vmin.f32 %v874, %v875
      %vm877 = vcmp.eq.f32.partialorder %v755, %v855
      %vm878 = vcmp.eq.f32.partialorder %v755, %v876
      %vm879 = vcmp.eq.f32.partialorder %v756, %v855
      %vm880 = vcmp.eq.f32.partialorder %v756, %v876
      %vm881 = vcmp.eq.f32.partialorder %v757, %v855
      %vm882 = vcmp.eq.f32.partialorder %v757, %v876
      %vm883 = vcmp.eq.f32.partialorder %v758, %v855
      %vm884 = vcmp.eq.f32.partialorder %v758, %v876
      %vm885 = vcmp.eq.f32.partialorder %v759, %v855
      %vm886 = vcmp.eq.f32.partialorder %v759, %v876
      %vm887 = vcmp.eq.f32.partialorder %v760, %v855
      %vm888 = vcmp.eq.f32.partialorder %v760, %v876
      %vm889 = vcmp.eq.f32.partialorder %v761, %v855
      %vm890 = vcmp.eq.f32.partialorder %v761, %v876
      %vm891 = vcmp.eq.f32.partialorder %v762, %v855
      %vm892 = vcmp.eq.f32.partialorder %v762, %v876
      %vm893 = vcmp.eq.f32.partialorder %v763, %v855
      %vm894 = vcmp.eq.f32.partialorder %v763, %v876
      %vm895 = vcmp.eq.f32.partialorder %v764, %v855
      %vm896 = vcmp.eq.f32.partialorder %v764, %v876
      %vm897 = vcmp.eq.f32.partialorder %v765, %v855
      %vm898 = vcmp.eq.f32.partialorder %v765, %v876
      %vm899 = vcmp.eq.f32.partialorder %v766, %v855
      %vm900 = vcmp.eq.f32.partialorder %v766, %v876
      %vm901 = vcmp.eq.f32.partialorder %v767, %v855
      %vm902 = vcmp.eq.f32.partialorder %v767, %v876
      %vm903 = vcmp.eq.f32.partialorder %v768, %v855
      %vm904 = vcmp.eq.f32.partialorder %v768, %v876
      %vm905 = vcmp.eq.f32.partialorder %v769, %v855
      %vm906 = vcmp.eq.f32.partialorder %v769, %v876
      %vm907 = vcmp.eq.f32.partialorder %v770, %v855
      %vm908 = vcmp.eq.f32.partialorder %v770, %v876
      %v909 = vsel %vm877, 1, 0
      %v910 = vsel %vm878, 1, 0
      %v911 = vsel %vm879, 1, 0
      %v912 = vsel %vm880, 1, 0
      %v913 = vsel %vm881, 1, 0
      %v914 = vsel %vm882, 1, 0
      %v915 = vsel %vm883, 1, 0
      %v916 = vsel %vm884, 1, 0
      %v917 = vsel %vm885, 1, 0
      %v918 = vsel %vm886, 1, 0
      %v919 = vsel %vm887, 1, 0
      %v920 = vsel %vm888, 1, 0
      %v921 = vsel %vm889, 1, 0
      %v922 = vsel %vm890, 1, 0
      %v923 = vsel %vm891, 1, 0
      %v924 = vsel %vm892, 1, 0
      %v925 = vsel %vm893, 1, 0
      %v926 = vsel %vm894, 1, 0
      %v927 = vsel %vm895, 1, 0
      %v928 = vsel %vm896, 1, 0
      %v929 = vsel %vm897, 1, 0
      %v930 = vsel %vm898, 1, 0
      %v931 = vsel %vm899, 1, 0
      %v932 = vsel %vm900, 1, 0
      %v933 = vsel %vm901, 1, 0
      %v934 = vsel %vm902, 1, 0
      %v935 = vsel %vm903, 1, 0
      %v936 = vsel %vm904, 1, 0
      %v937 = vsel %vm905, 1, 0
      %v938 = vsel %vm906, 1, 0
      %v939 = vsel %vm907, 1, 0
      %v940 = vsel %vm908, 1, 0
      %v941 = vcvt.s32.f32 %v909
      %v942 = vcvt.s32.f32 %v910
      %v943 = vcvt.s32.f32 %v911
      %v944 = vcvt.s32.f32 %v912
      %v945 = vcvt.s32.f32 %v913
      %v946 = vcvt.s32.f32 %v914
      %v947 = vcvt.s32.f32 %v915
      %v948 = vcvt.s32.f32 %v916
      %v949 = vcvt.s32.f32 %v917
      %v950 = vcvt.s32.f32 %v918
      %v951 = vcvt.s32.f32 %v919
      %v952 = vcvt.s32.f32 %v920
      %v953 = vcvt.s32.f32 %v921
      %v954 = vcvt.s32.f32 %v922
      %v955 = vcvt.s32.f32 %v923
      %v956 = vcvt.s32.f32 %v924
      %v957 = vcvt.s32.f32 %v925
      %v958 = vcvt.s32.f32 %v926
      %v959 = vcvt.s32.f32 %v927
      %v960 = vcvt.s32.f32 %v928
      %v961 = vcvt.s32.f32 %v929
      %v962 = vcvt.s32.f32 %v930
      %v963 = vcvt.s32.f32 %v931
      %v964 = vcvt.s32.f32 %v932
      %v965 = vcvt.s32.f32 %v933
      %v966 = vcvt.s32.f32 %v934
      %v967 = vcvt.s32.f32 %v935
      %v968 = vcvt.s32.f32 %v936
      %v969 = vcvt.s32.f32 %v937
      %v970 = vcvt.s32.f32 %v938
      %v971 = vcvt.s32.f32 %v939
      %v972 = vcvt.s32.f32 %v940
      %973 = vmatpush.msra.mxu0 %v971
      %974 = vmatpush.msra.mxu0 %v969
      %975 = vmatpush.msra.mxu0 %v967
      %976 = vmatpush.msra.mxu0 %v965
      %977 = vmatpush.msra.mxu0 %v963
      %978 = vmatpush.msra.mxu0 %v961
      %979 = vmatpush.msra.mxu0 %v959
      %980 = vmatpush.msra.mxu0 %v957
      %981 = vmatpush.msra.mxu0 %v955
      %982 = vmatpush.msra.mxu0 %v953
      %983 = vmatpush.msra.mxu0 %v951
      %984 = vmatpush.msra.mxu0 %v949
      %985 = vmatpush.msra.mxu0 %v947
      %986 = vmatpush.msra.mxu0 %v945
      %987 = vmatpush.msra.mxu0 %v943
      %988 = vmatpush.msra.mxu0 %v941
      %989 = vmatmul.f32.gmra.mxu0 %v347
      %v990 = vpop.f32.mrf.mxu0
      %v991 = vadd.f32 0.0, %v990
      %992 = vdwg.mxu0
      %993 = vmatpush.msra.mxu0 %v972
      %994 = vmatpush.msra.mxu0 %v970
      %995 = vmatpush.msra.mxu0 %v968
      %996 = vmatpush.msra.mxu0 %v966
      %997 = vmatpush.msra.mxu0 %v964
      %998 = vmatpush.msra.mxu0 %v962
      %999 = vmatpush.msra.mxu0 %v960
      %1000 = vmatpush.msra.mxu0 %v958
      %1001 = vmatpush.msra.mxu0 %v956
      %1002 = vmatpush.msra.mxu0 %v954
      %1003 = vmatpush.msra.mxu0 %v952
      %1004 = vmatpush.msra.mxu0 %v950
      %1005 = vmatpush.msra.mxu0 %v948
      %1006 = vmatpush.msra.mxu0 %v946
      %1007 = vmatpush.msra.mxu0 %v944
      %1008 = vmatpush.msra.mxu0 %v942
      %1009 = vmatmul.f32.gmra.mxu0 %v347
      %v1010 = vpop.f32.mrf.mxu0
      %v1011 = vadd.f32 0.0, %v1010
      %1012 = vdwg.mxu0
      %v1015 = vrot.slane %v1011, 4
      %v1016 = vsel %vm417, %v991, %v1015
      %1018 = vst [vmem:[%s313] sm:$0xff] %v1016
      %v1019 = vadd.f32 %v941, %v942
      %1020 = vadd.xlane.f32.xlu0 %v1019
      %v1021 = vpop.xlane.xlu0 %1020
      %v1022 = vadd.f32 %v943, %v944
      %1023 = vadd.xlane.f32.xlu0 %v1022
      %v1024 = vpop.xlane.xlu0 %1023
      %v1025 = vadd.f32 %v945, %v946
      %1026 = vadd.xlane.f32.xlu0 %v1025
      %v1027 = vpop.xlane.xlu0 %1026
      %v1028 = vadd.f32 %v947, %v948
      %1029 = vadd.xlane.f32.xlu0 %v1028
      %v1030 = vpop.xlane.xlu0 %1029
      %v1031 = vadd.f32 %v949, %v950
      %1032 = vadd.xlane.f32.xlu0 %v1031
      %v1033 = vpop.xlane.xlu0 %1032
      %v1034 = vadd.f32 %v951, %v952
      %1035 = vadd.xlane.f32.xlu0 %v1034
      %v1036 = vpop.xlane.xlu0 %1035
      %v1037 = vadd.f32 %v953, %v954
      %1038 = vadd.xlane.f32.xlu0 %v1037
      %v1039 = vpop.xlane.xlu0 %1038
      %v1040 = vadd.f32 %v955, %v956
      %1041 = vadd.xlane.f32.xlu0 %v1040
      %v1042 = vpop.xlane.xlu0 %1041
      %v1043 = vadd.f32 %v957, %v958
      %1044 = vadd.xlane.f32.xlu0 %v1043
      %v1045 = vpop.xlane.xlu0 %1044
      %v1046 = vadd.f32 %v959, %v960
      %1047 = vadd.xlane.f32.xlu0 %v1046
      %v1048 = vpop.xlane.xlu0 %1047
      %v1049 = vadd.f32 %v961, %v962
      %1050 = vadd.xlane.f32.xlu0 %v1049
      %v1051 = vpop.xlane.xlu0 %1050
      %v1052 = vadd.f32 %v963, %v964
      %1053 = vadd.xlane.f32.xlu0 %v1052
      %v1054 = vpop.xlane.xlu0 %1053
      %v1055 = vadd.f32 %v965, %v966
      %1056 = vadd.xlane.f32.xlu0 %v1055
      %v1057 = vpop.xlane.xlu0 %1056
      %v1058 = vadd.f32 %v967, %v968
      %1059 = vadd.xlane.f32.xlu0 %v1058
      %v1060 = vpop.xlane.xlu0 %1059
      %v1061 = vadd.f32 %v969, %v970
      %1062 = vadd.xlane.f32.xlu0 %v1061
      %v1063 = vpop.xlane.xlu0 %1062
      %v1064 = vadd.f32 %v971, %v972
      %1065 = vadd.xlane.f32.xlu0 %v1064
      %v1066 = vpop.xlane.xlu0 %1065
      %vm1067 = vcmask 7168
      %1068 = vst.msk [vmem:[%s323] sm:$0xff] %vm1067, %v1021
      %1069 = vst.msk [vmem:[%s323 + $0x8] sm:$0xff] %vm1067, %v1024
      %1070 = vst.msk [vmem:[%s323 + $0x10] sm:$0xff] %vm1067, %v1027
      %1071 = vst.msk [vmem:[%s323 + $0x18] sm:$0xff] %vm1067, %v1030
      %1072 = vst.msk [vmem:[%s323 + $0x20] sm:$0xff] %vm1067, %v1033
      %1073 = vst.msk [vmem:[%s323 + $0x28] sm:$0xff] %vm1067, %v1036
      %1074 = vst.msk [vmem:[%s323 + $0x30] sm:$0xff] %vm1067, %v1039
      %1075 = vst.msk [vmem:[%s323 + $0x38] sm:$0xff] %vm1067, %v1042
      %1076 = vst.msk [vmem:[%s323 + $0x40] sm:$0xff] %vm1067, %v1045
      %1077 = vst.msk [vmem:[%s323 + $0x48] sm:$0xff] %vm1067, %v1048
      %1078 = vst.msk [vmem:[%s323 + $0x50] sm:$0xff] %vm1067, %v1051
      %1079 = vst.msk [vmem:[%s323 + $0x58] sm:$0xff] %vm1067, %v1054
      %1080 = vst.msk [vmem:[%s323 + $0x60] sm:$0xff] %vm1067, %v1057
      %1081 = vst.msk [vmem:[%s323 + $0x68] sm:$0xff] %vm1067, %v1060
      %1082 = vst.msk [vmem:[%s323 + $0x70] sm:$0xff] %vm1067, %v1063
      %1083 = vst.msk [vmem:[%s323 + $0x78] sm:$0xff] %vm1067, %v1066
      %1084 = vst [vmem:[#allocation1] ss:$2 sm:$0xff] %v330
      %v1085 = vld.sshfl [vmem:[#allocation1] sm:$0xff pattern:$0x75316420]
      %v1086 = vld.sshfl [vmem:[#allocation1 + $0x8] sm:$0xff pattern:$0x75316420]
      %v1089 = vsub.f32 %v991, %v1085
      %v1090 = vsub.f32 %v1011, %v1086
      %v1091 = vmul.f32 %v1089, %v1089
      %v1092 = vmul.f32 %v1090, %v1090
      %v1093 = vsel %vm417, %v1091, 0.0
      %v1094 = vsel %vm417, %v1092, 0.0
      %v1095 = vadd.f32 %v1093, %v1094
      %1096 = vadd.xlane.f32.xlu0 %v1095
      %v1097 = vpop.xlane.xlu0 %1096
      %v1098 = vsel %vm417, %v1097, 0.0
      %v1099 = vrot.slane %v1098, 4
      %v1100 = vadd.f32 %v1098, %v1099
      %v1101 = vrot.slane %v1100, 2
      %v1102 = vadd.f32 %v1100, %v1101
      %v1103 = vrot.slane %v1102, 1
      %v1104 = vadd.f32 %v1102, %v1103
      %vm1105 = vcmask 0
      %1106 = vst.msk [vmem:[%s329] sm:$0x1] %vm1105, %v1104
      %s1107 = smul.u32 2, %s23
      %p1108 = scmp.lt.s32.totalorder %s22, 1
      %s1109 = scalar_select %p1108, %s22, 1
      %p1110 = scmp.lt.s32.totalorder %s1107, 1
      %s1111 = scalar_select %p1110, %s1107, 1
      %s1112 = smul.addr %s1109, 2
      %s1113 = sadd.s32 %s1111, %s1112
      %s1114 = smul.addr %s1113, 4
      %s1115 = scalar_lea.vmem %s4, %s1114
      %p1116 = scmp.lt.s32.totalorder %s22, 1
      %s1117 = scalar_select %p1116, %s22, 1
      %p1118 = scmp.lt.s32.totalorder %s23, 0
      %s1119 = scalar_select %p1118, %s23, 0
      %s1120 = smul.addr %s1119, 16
      %s1121 = smul.addr %s1117, 16
      %s1122 = sadd.s32 %s1120, %s1121
      %s1123 = smul.addr %s1122, 8
      %s1124 = scalar_lea.vmem %s5, %s1123
      %p1125 = scmp.lt.s32.totalorder %s22, 1
      %s1126 = scalar_select %p1125, %s22, 1
      %p1127 = scmp.lt.s32.totalorder %s23, 0
      %s1128 = scalar_select %p1127, %s23, 0
      %s1129 = sadd.s32 %s1128, %s1126
      %s1130 = scalar_lea.vmem %s6, %s1129
      // Predicated region
      $region37: #{codebook_forward.1} parent=35 // pred_check
        %p1131 = pneg %p141
      $region38: #{codebook_forward.1} parent=35 // pred_check_branch
        %1133 = sbr.rel (%p1131) target = $region40
      $region39: #{codebook_forward.1} parent=35 // pred_region
        %s1134 = smul.u32 2, %s23
      $region40: #{codebook_forward.1} parent=35 // pred_fallthru
        _
      // Predicated region
      $region41: #{codebook_forward.1} parent=35 // pred_check
        %p1135 = pneg %p169
      $region42: #{codebook_forward.1} parent=35 // pred_check_branch
        %1137 = sbr.rel (%p1135) target = $region44
      $region43: #{codebook_forward.1} parent=35 // pred_region
        _
      $region44: #{codebook_forward.1} parent=35 // pred_fallthru
        _
      // Predicated region
      $region45: #{codebook_forward.1} parent=35 // pred_check
        %p1138 = pneg %p197
      $region46: #{codebook_forward.1} parent=35 // pred_check_branch
        %1140 = sbr.rel (%p1138) target = $region48
      $region47: #{codebook_forward.1} parent=35 // pred_region
        _
      $region48: #{codebook_forward.1} parent=35 // pred_fallthru
        _
    $region36: #{codebook_forward.1} parent=5 // pred_fallthru
      _
    %p1141 = scmp.le.s32.totalorder 2, %s13
    // Predicated region
    $region49: #{codebook_forward.1} parent=5 // pred_check
      %p1142 = pneg %p1141
    $region50: #{codebook_forward.1} parent=5 // pred_check_branch
      %1144 = sbr.rel (%p1142) target = $region52
    $region51: #{codebook_forward.1} parent=5 // pred_region
      %s1145 = ssub.s32 %s13, 2
      // Predicated region
      $region53: #{codebook_forward.1} parent=51 // pred_check
        %p1146 = pneg %p147
      $region54: #{codebook_forward.1} parent=51 // pred_check_branch
        %1148 = sbr.rel (%p1146) target = $region56
      $region55: #{codebook_forward.1} parent=51 // pred_region
        %s1149 = smul.u32 2, %s25
        %p1150 = scmp.lt.s32.totalorder %s24, 1
        %s1151 = scalar_select %p1150, %s24, 1
        %p1152 = scmp.lt.s32.totalorder %s1149, 1
        %s1153 = scalar_select %p1152, %s1149, 1
        %s1154 = smul.addr %s1151, 2
        %s1155 = sadd.s32 %s1153, %s1154
        %s1156 = smul.addr %s1155, 4
        %s1157 = scalar_lea.vmem %s4, %s1156
      $region56: #{codebook_forward.1} parent=51 // pred_fallthru
        _
      // Predicated region
      $region57: #{codebook_forward.1} parent=51 // pred_check
        %p1158 = pneg %p175
      $region58: #{codebook_forward.1} parent=51 // pred_check_branch
        %1160 = sbr.rel (%p1158) target = $region60
      $region59: #{codebook_forward.1} parent=51 // pred_region
        %p1161 = scmp.lt.s32.totalorder %s24, 1
        %s1162 = scalar_select %p1161, %s24, 1
        %p1163 = scmp.lt.s32.totalorder %s25, 0
        %s1164 = scalar_select %p1163, %s25, 0
        %s1165 = smul.addr %s1164, 16
        %s1166 = smul.addr %s1162, 16
        %s1167 = sadd.s32 %s1165, %s1166
        %s1168 = smul.addr %s1167, 8
        %s1169 = scalar_lea.vmem %s5, %s1168
      $region60: #{codebook_forward.1} parent=51 // pred_fallthru
        _
      // Predicated region
      $region61: #{codebook_forward.1} parent=51 // pred_check
        %p1170 = pneg %p203
      $region62: #{codebook_forward.1} parent=51 // pred_check_branch
        %1172 = sbr.rel (%p1170) target = $region64
      $region63: #{codebook_forward.1} parent=51 // pred_region
        %p1173 = scmp.lt.s32.totalorder %s24, 1
        %s1174 = scalar_select %p1173, %s24, 1
        %p1175 = scmp.lt.s32.totalorder %s25, 0
        %s1176 = scalar_select %p1175, %s25, 0
        %s1177 = sadd.s32 %s1176, %s1174
        %s1178 = scalar_lea.vmem %s6, %s1177
      $region64: #{codebook_forward.1} parent=51 // pred_fallthru
        _
    $region52: #{codebook_forward.1} parent=5 // pred_fallthru
      _
  $region6: #{codebook_forward.1} parent=0 // loop_footer
    %s17 = sadd.s32 1, %s13
  $region7: #{codebook_forward.1} parent=0 // loop_footer_branch
    %12 = sbr.rel target = $region3
  $region8: #{codebook_forward.1} parent=0 // loop_exit
    _

</llo_original>
